<compile_context>
chip_gen: v7x
topology: tpu7x:2x2x1
jax: 0.10.0
libtpu: 0.0.40
codegen_flags: <defaults>
</compile_context>

<pallas_src>
import math

import jax
import jax.numpy as jnp
from jax.experimental import pallas as pl
from jax.experimental.pallas import tpu as pltpu


def _round_up(x, m):
    return (x + m - 1) // m * m


def _pick_tile(n, target, gran):
    """Largest multiple of `gran` that divides `n` and is <= max(target, gran)."""
    t = max(min(target, n) // gran * gran, gran)
    while t > gran and n % t != 0:
        t -= gran
    return t


def proj_kernel(x_ref, w_ref, b_ref, o_ref, acc_ref):
    # Grid = (vocab tile j, row tile i, d_model tile k); k is the reduction
    # axis (innermost, "arbitrary").  acc_ref is the per-(j, i) f32 accumulator.
    k = pl.program_id(2)

    @pl.when(k == 0)
    def _():
        acc_ref[...] = jnp.zeros_like(acc_ref)

    acc_ref[...] += jnp.dot(x_ref[...], w_ref[...],
                            preferred_element_type=jnp.float32)

    @pl.when(k == pl.num_programs(2) - 1)
    def _():
        o_ref[...] = (acc_ref[...] + b_ref[...]).astype(o_ref.dtype)


def projection_layer(x, w, b, *, tm=512, tv=512, tk=512,
                     compute_dtype=jnp.bfloat16, out_dtype=None):
    """x: [B, S, d_model]; w: [d_model, vocab] (pre-transposed); b: [vocab]."""
    B, S, K = x.shape
    V = w.shape[1]
    M = B * S
    out_dtype = x.dtype if out_dtype is None else out_dtype

    # --- Tile selection (lane = 128, sublane = 8 granularity). -------------
    # Rows (M): clamp for small inputs; pad rows (cheap: M*K) if tm doesn't divide.
    tm = min(_round_up(tm, 8), _round_up(M, 8))
    Mp = _round_up(M, tm)

    # Vocab (V): avoid padding the (large) weight -- pick tv dividing V.
    if V % 128 == 0:
        tv = _pick_tile(V, tv, 128)
        Vp = V
    else:
        # TODO(synk): rare path (vocab not a multiple of 128) pads W columns.
        Vp = _round_up(V, 128)
        tv = min(_round_up(tv, 128), Vp)
        Vp = _round_up(Vp, tv)

    # d_model (K): tile the reduction so VMEM use is independent of d_model.
    if K % 128 == 0:
        tk = _pick_tile(K, tk, 128)
    else:
        tk = K  # block dim equal to the full axis is always legal
    nk = K // tk

    # --- Prepare operands (only x rows are ever padded in the common case). --
    x2 = x.reshape(M, K)
    if Mp != M:
        x2 = jnp.pad(x2, ((0, Mp - M), (0, 0)))
    x2 = x2.astype(compute_dtype)
    wp = w.astype(compute_dtype)
    bp = b.astype(jnp.float32)
    if Vp != V:
        wp = jnp.pad(wp, ((0, 0), (0, Vp - V)))
        bp = jnp.pad(bp, ((0, Vp - V),))
    bp = bp.reshape(1, Vp)

    grid = (Vp // tv, Mp // tm, nk)

    # --- VMEM budgeting (generation aware). ---------------------------------
    bc = jnp.dtype(compute_dtype).itemsize
    bo = jnp.dtype(out_dtype).itemsize
    # Double-buffered pipelined tiles + the f32 accumulator scratch.
    vmem_needed = (2 * (tm * tk * bc + tk * tv * bc + tv * 4 + tm * tv * bo)
                   + tm * tv * 4)
    try:
        vmem_cap = int(pltpu.get_tpu_info().vmem_capacity_bytes)
    except Exception:
        vmem_cap = 64 * 1024 * 1024  # most constrained generation (v7x per-TC)
    vmem_limit = max(vmem_needed + (4 << 20), 32 << 20)
    vmem_limit = int(min(vmem_limit, vmem_cap - (12 << 20)))

    cost = pl.CostEstimate(
        flops=2 * Mp * K * Vp,
        transcendentals=0,
        bytes_accessed=int(
            (Vp // tv) * Mp * K * bc       # x re-streamed once per vocab tile
            + (Mp // tm) * K * Vp * bc     # W re-streamed once per row tile
            + Vp * 4                       # bias
            + Mp * Vp * bo),               # output stream
    )

    out = pl.pallas_call(
        proj_kernel,
        out_shape=jax.ShapeDtypeStruct((Mp, Vp), out_dtype),
        grid_spec=pltpu.PrefetchScalarGridSpec(
            num_scalar_prefetch=0,
            grid=grid,
            in_specs=[
                pl.BlockSpec((tm, tk), lambda j, i, k: (i, k)),   # x rows
                pl.BlockSpec((tk, tv), lambda j, i, k: (k, j)),   # W column slab
                pl.BlockSpec((1, tv), lambda j, i, k: (0, j)),    # bias (f32)
            ],
            out_specs=pl.BlockSpec((tm, tv), lambda j, i, k: (i, j)),
            scratch_shapes=[pltpu.VMEM((tm, tv), jnp.float32)],
        ),
        compiler_params=pltpu.CompilerParams(
            # Vocab axis leads so v7x megacore shards W reads across the 2 TCs;
            # the d_model (reduction) axis is last and "arbitrary".
            dimension_semantics=("parallel", "parallel", "arbitrary"),
            vmem_limit_bytes=vmem_limit,
        ),
        cost_estimate=cost,
    )(x2, wp, bp)

    if Mp != M or Vp != V:
        out = out[:M, :V]
    return out.reshape(B, S, V)


if __name__ == "__main__":
    # Small shapes consistent with the module: x [B, S, d_model] -> [B, S, vocab].
    B, S, d_model, vocab = 2, 16, 256, 512
    key = jax.random.PRNGKey(0)
    kx, kw, kb = jax.random.split(key, 3)

    lim = 1.0 / math.sqrt(d_model)
    x = jax.random.normal(kx, (B, S, d_model), dtype=jnp.float32)
    # nn.Linear stores weight as [vocab, d_model]; we keep it pre-transposed
    # ([d_model, vocab]) so the kernel does a row-major matmul on the MXU.
    w = jax.random.uniform(kw, (d_model, vocab), jnp.float32, -lim, lim)
    b = jax.random.uniform(kb, (vocab,), jnp.float32, -lim, lim)

    # Small tiles so the (vocab, rows, d_model) grid and the K-accumulator
    # init/finalize path are all exercised: grid = (2, 2, 2).
    y = projection_layer(x, w, b, tm=16, tv=256, tk=128)
    y = jax.block_until_ready(y)

    # Reference in plain JAX (same semantics as ProjectionLayer.forward).
    ref = x @ w + b
    assert y.shape == (B, S, vocab)
    err = float(jnp.max(jnp.abs(y - ref)))
    # bf16 inputs with f32 accumulation: errors are O(1e-2) at worst here.
    assert err < 3e-2, err
    print("KERNEL_OK")
</pallas_src>

<mosaic_0001>
module attributes {stable_mosaic.version = 11 : i64} {
  func.func @proj_kernel(%arg0: i32, %arg1: i32, %arg2: i32, %arg3: memref<16x128xbf16, #tpu.memory_space<vmem>>, %arg4: memref<128x256xbf16, #tpu.memory_space<vmem>>, %arg5: memref<1x256xf32, #tpu.memory_space<vmem>>, %arg6: memref<16x256xf32, #tpu.memory_space<vmem>>, %arg7: memref<16x256xf32, #tpu.memory_space<vmem>>) attributes {dimension_semantics = [#tpu.dimension_semantics<parallel>, #tpu.dimension_semantics<parallel>, #tpu.dimension_semantics<arbitrary>], iteration_bounds = array<i64: 2, 2, 2>, scalar_prefetch = 0 : i64, scratch_operands = 1 : i64, tpu.core_type = #tpu.core_type<tc>, window_params = [{transform_indices = @transform_0, window_bounds = array<i64: 16, 128>}, {transform_indices = @transform_1, window_bounds = array<i64: 128, 256>}, {transform_indices = @transform_2, window_bounds = array<i64: 1, 256>}, {transform_indices = @transform_3, window_bounds = array<i64: 16, 256>}]} {
    %c0_i32 = arith.constant 0 : i32
    %0 = arith.cmpi eq, %arg2, %c0_i32 : i32
    %1 = arith.extui %0 : i1 to i32
    %c0_i32_0 = arith.constant 0 : i32
    %2 = arith.cmpi ne, %1, %c0_i32_0 : i32
    scf.if %2 {
      %cst_9 = arith.constant 0.000000e+00 : f32
      %12 = vector.broadcast %cst_9 : f32 to vector<16x256xf32>
      %c0_10 = arith.constant 0 : index
      %c0_11 = arith.constant 0 : index
      %13 = vector.load %arg7[%c0_10, %c0_11] : memref<16x256xf32, #tpu.memory_space<vmem>>, vector<16x256xf32>
      tpu.vector_store %arg7[%c0_10, %c0_11], %12 {strides = array<i32>} : memref<16x256xf32, #tpu.memory_space<vmem>>, vector<16x256xf32>,
    } else {
    }
    %c0 = arith.constant 0 : index
    %c0_1 = arith.constant 0 : index
    %3 = vector.load %arg7[%c0, %c0_1] : memref<16x256xf32, #tpu.memory_space<vmem>>, vector<16x256xf32>
    %c0_2 = arith.constant 0 : index
    %c0_3 = arith.constant 0 : index
    %4 = vector.load %arg3[%c0_2, %c0_3] : memref<16x128xbf16, #tpu.memory_space<vmem>>, vector<16x128xbf16>
    %c0_4 = arith.constant 0 : index
    %c0_5 = arith.constant 0 : index
    %5 = vector.load %arg4[%c0_4, %c0_5] : memref<128x256xbf16, #tpu.memory_space<vmem>>, vector<128x256xbf16>
    %cst = arith.constant dense<0.000000e+00> : vector<16x256xf32>
    %6 = tpu.matmul %4, %5, %cst {dimension_numbers = #tpu.dot_dimension_numbers<[1], [0], [0], [1], [0, 0, 1, 1], [], []>} : vector<16x128xbf16>, vector<128x256xbf16>, vector<16x256xf32> -> vector<16x256xf32>
    %7 = arith.addf %3, %6 : vector<16x256xf32>
    %c0_6 = arith.constant 0 : index
    %c0_7 = arith.constant 0 : index
    %8 = vector.load %arg7[%c0_6, %c0_7] : memref<16x256xf32, #tpu.memory_space<vmem>>, vector<16x256xf32>
    tpu.vector_store %arg7[%c0_6, %c0_7], %7 {strides = array<i32>} : memref<16x256xf32, #tpu.memory_space<vmem>>, vector<16x256xf32>,
    %c1_i32 = arith.constant 1 : i32
    %9 = arith.cmpi eq, %arg2, %c1_i32 : i32
    %10 = arith.extui %9 : i1 to i32
    %c0_i32_8 = arith.constant 0 : i32
    %11 = arith.cmpi ne, %10, %c0_i32_8 : i32
    scf.if %11 {
      %c0_9 = arith.constant 0 : index
      %c0_10 = arith.constant 0 : index
      %12 = vector.load %arg7[%c0_9, %c0_10] : memref<16x256xf32, #tpu.memory_space<vmem>>, vector<16x256xf32>
      %c0_11 = arith.constant 0 : index
      %c0_12 = arith.constant 0 : index
      %13 = vector.load %arg5[%c0_11, %c0_12] : memref<1x256xf32, #tpu.memory_space<vmem>>, vector<1x256xf32>
      %14 = vector.broadcast %13 : vector<1x256xf32> to vector<16x256xf32>
      %15 = arith.addf %12, %14 : vector<16x256xf32>
      %c0_13 = arith.constant 0 : index
      %c0_14 = arith.constant 0 : index
      %16 = vector.load %arg6[%c0_13, %c0_14] : memref<16x256xf32, #tpu.memory_space<vmem>>, vector<16x256xf32>
      tpu.vector_store %arg6[%c0_13, %c0_14], %15 {strides = array<i32>} : memref<16x256xf32, #tpu.memory_space<vmem>>, vector<16x256xf32>,
    } else {
    }
    return
  }
  func.func @transform_0(%arg0: i32, %arg1: i32, %arg2: i32) -> (i32, i32) {
    %c0_i32 = arith.constant 0 : i32
    return %arg1, %arg2 : i32, i32
  }
  func.func @transform_1(%arg0: i32, %arg1: i32, %arg2: i32) -> (i32, i32) {
    %c0_i32 = arith.constant 0 : i32
    return %arg2, %arg0 : i32, i32
  }
  func.func @transform_2(%arg0: i32, %arg1: i32, %arg2: i32) -> (i32, i32) {
    %c0_i32 = arith.constant 0 : i32
    %c0_i32_0 = arith.constant 0 : i32
    return %c0_i32, %arg0 : i32, i32
  }
  func.func @transform_3(%arg0: i32, %arg1: i32, %arg2: i32) -> (i32, i32) {
    %c0_i32 = arith.constant 0 : i32
    return %arg1, %arg0 : i32, i32
  }
}

</mosaic_0001>

<llo_original>
// kernel: tpu_custom_call.1
$region0: #{tpu_custom_call.1}
  #allocation0 [shape = 'u32[]', space=smem, size = 0x4, offset = 0x4, fixed_abs, tag = 'smem constant byte address 0x4 - core index']
  #allocation1 [shape = 'u32[144,128]{1,0:T(1,128)}', space=vmem, size = 0x12000, scoped, tag = 'internal scratch']
  #allocation2 [shape = 'f32[16,256]{1,0:T(8,128)}', space=vmem, size = 0x4000, scoped, tag = 'scratch operand']
  %s0 = inlined_call_operand.hbm [shape: bf16[32,256], index: 0, kind: input, shape index: {}]
  %s1 = inlined_call_operand.hbm [shape: bf16[256,512], index: 1, kind: input, shape index: {}]
  %s2 = inlined_call_operand.vmem [shape: f32[1,512], index: 2, kind: input, shape index: {}]
  %s3 = inlined_call_operand.hbm [shape: f32[32,512], index: 3, kind: output, shape index: {}]
  %s4 = sld [smem:[#allocation0]]
  $region61: #{tpu_custom_call.1} parent=0
    _
  %s6 = ssub.s32 1, %s4
  %s7 = scalar_select 0, %s6, %s4
  $region1: #{tpu_custom_call.1} parent=0
    #allocation3 [shape = 'u8[8192]{0}', space=vmem, size = 0x2000, scoped, tag = 'input window, operand 0']
    #allocation4 [shape = 's32[2]{0}', space=sflag, size = 0x8, scoped, tag = 'scoped memory for tpu_custom_call.1']
    #allocation5 [shape = 's32[2]{0}', space=sflag, size = 0x8, scoped, tag = 'scoped memory for tpu_custom_call.1']
    #allocation6 [shape = 'u8[131072]{0}', space=vmem, size = 0x20000, scoped, tag = 'input window, operand 1']
    #allocation7 [shape = 's32[2]{0}', space=sflag, size = 0x8, scoped, tag = 'scoped memory for tpu_custom_call.1']
    #allocation8 [shape = 'u8[32768]{0}', space=vmem, size = 0x8000, scoped, tag = 'output window, operand 0']
    %8 = vsyncpa [#allocation4], 0
    %s9 = scalar_lea.sflag [#allocation4], 1
    %10 = vsyncpa %s9, 0
    %11 = vsyncpa [#allocation7], 0
    %s12 = scalar_lea.sflag [#allocation7], 1
    %13 = vsyncpa %s12, 0
    %14 = vsyncpa [#allocation5], 0
    %s15 = scalar_lea.sflag [#allocation5], 1
    %16 = vsyncpa %s15, 0
    loop: start=0, step=1, limit=10
    $region2: #{tpu_custom_call.1} parent=1 // loop_pre_header
      _
    $region3: #{tpu_custom_call.1} parent=1 // loop_header
      %s18 = sphi 0, %s22
      %p19 = scmp.ge.s32.totalorder %s18, 10
      %s25 = sphi 0, %s44
      %s26 = sphi 0, %s40
      %s27 = sphi 0, %s36
      %s28 = sphi 0, %s25
      %s29 = sphi 0, %s26
      %s30 = sphi 0, %s27
      %s31 = sphi 0, %s28
      %s32 = sphi 0, %s29
      %s33 = sphi 0, %s30
      %s49 = sphi 0, %s51
      %s52 = sphi 0, %s49
      %s53 = sphi 0, %s52
      %s69 = sphi 0, %s53
      %s77 = sphi 0, %s79
      %s80 = sphi 0, %s77
      %s81 = sphi 0, %s80
      %s97 = sphi 0, %s81
      %s103 = sphi 0, %s105
      %s106 = sphi 0, %s103
      %s107 = sphi 0, %s106
      %s123 = sphi 0, %s107
      %s131 = sphi 0, %s133
      %s134 = sphi 0, %s131
      %s135 = sphi 0, %s134
      %s151 = sphi 0, %s135
    $region4: #{tpu_custom_call.1} parent=1 // loop_header_branch
      %21 = sbr.rel (%p19) target = $region8
    $region5: #{tpu_custom_call.1} parent=1 // loop_body
      %s23 = ssub.s32 %s18, 1
      %s24 = ssub.s32 %s18, 2
      %s34 = sadd.s32 1, %s27
      %p35 = scmp.ge.s32.totalorder %s34, 2
      %s36 = scalar_select %p35, 0, %s34
      %s37 = sadd.s32 1, %s26
      %s38 = scalar_select %p35, %s37, %s26
      %p39 = scmp.ge.s32.totalorder %s38, 2
      %s40 = scalar_select %p39, 0, %s38
      %s41 = sadd.s32 1, %s25
      %s42 = scalar_select %p39, %s41, %s25
      %p43 = scmp.ge.s32.totalorder %s42, 2
      %s44 = scalar_select %p43, 0, %s42
      %s45 = ssub.s32 %s26, %s40
      %s46 = ssub.s32 %s27, %s36
      %s47 = sor.u32 %s45, %s46
      %p48 = scmp.eq.s32.totalorder %s47, 0
      %s50 = sadd.s32 %s49, 1
      %s51 = scalar_select %p48, %s49, %s50
      %p54 = pneg %p48
      %p55 = scmp.eq.s32.totalorder %s18, 7
      %p56 = por %p54, %p55
      %p57 = scmp.ne.s32.totalorder %s49, %s52
      %p58 = scmp.eq.s32.totalorder %s18, 0
      %p59 = por %p57, %p58
      %p60 = scmp.ne.s32.totalorder %s49, %s52
      %p61 = scmp.eq.s32.totalorder %s23, 7
      %p62 = por %p60, %p61
      %p63 = scmp.ne.s32.totalorder %s52, %s53
      %p64 = scmp.eq.s32.totalorder %s23, 0
      %p65 = por %p63, %p64
      %p66 = scmp.ne.s32.totalorder %s52, %s53
      %p67 = scmp.eq.s32.totalorder %s24, 7
      %p68 = por %p66, %p67
      %p70 = scmp.ne.s32.totalorder %s53, %s69
      %p71 = scmp.eq.s32.totalorder %s24, 0
      %p72 = por %p70, %p71
      %s73 = ssub.s32 %s27, %s36
      %s74 = ssub.s32 %s25, %s44
      %s75 = sor.u32 %s73, %s74
      %p76 = scmp.eq.s32.totalorder %s75, 0
      %s78 = sadd.s32 %s77, 1
      %s79 = scalar_select %p76, %s77, %s78
      %p82 = pneg %p76
      %p83 = scmp.eq.s32.totalorder %s18, 7
      %p84 = por %p82, %p83
      %p85 = scmp.ne.s32.totalorder %s77, %s80
      %p86 = scmp.eq.s32.totalorder %s18, 0
      %p87 = por %p85, %p86
      %p88 = scmp.ne.s32.totalorder %s77, %s80
      %p89 = scmp.eq.s32.totalorder %s23, 7
      %p90 = por %p88, %p89
      %p91 = scmp.ne.s32.totalorder %s80, %s81
      %p92 = scmp.eq.s32.totalorder %s23, 0
      %p93 = por %p91, %p92
      %p94 = scmp.ne.s32.totalorder %s80, %s81
      %p95 = scmp.eq.s32.totalorder %s24, 7
      %p96 = por %p94, %p95
      %p98 = scmp.ne.s32.totalorder %s81, %s97
      %p99 = scmp.eq.s32.totalorder %s24, 0
      %p100 = por %p98, %p99
      %s101 = ssub.s32 %s25, %s44
      %p102 = scmp.eq.s32.totalorder %s101, 0
      %s104 = sadd.s32 %s103, 1
      %s105 = scalar_select %p102, %s103, %s104
      %p108 = pneg %p102
      %p109 = scmp.eq.s32.totalorder %s18, 7
      %p110 = por %p108, %p109
      %p111 = scmp.ne.s32.totalorder %s103, %s106
      %p112 = scmp.eq.s32.totalorder %s18, 0
      %p113 = por %p111, %p112
      %p114 = scmp.ne.s32.totalorder %s103, %s106
      %p115 = scmp.eq.s32.totalorder %s23, 7
      %p116 = por %p114, %p115
      %p117 = scmp.ne.s32.totalorder %s106, %s107
      %p118 = scmp.eq.s32.totalorder %s23, 0
      %p119 = por %p117, %p118
      %p120 = scmp.ne.s32.totalorder %s106, %s107
      %p121 = scmp.eq.s32.totalorder %s24, 7
      %p122 = por %p120, %p121
      %p124 = scmp.ne.s32.totalorder %s107, %s123
      %p125 = scmp.eq.s32.totalorder %s24, 0
      %p126 = por %p124, %p125
      %s127 = ssub.s32 %s26, %s40
      %s128 = ssub.s32 %s25, %s44
      %s129 = sor.u32 %s127, %s128
      %p130 = scmp.eq.s32.totalorder %s129, 0
      %s132 = sadd.s32 %s131, 1
      %s133 = scalar_select %p130, %s131, %s132
      %p136 = pneg %p130
      %p137 = scmp.eq.s32.totalorder %s18, 7
      %p138 = por %p136, %p137
      %p139 = scmp.ne.s32.totalorder %s131, %s134
      %p140 = scmp.eq.s32.totalorder %s18, 0
      %p141 = por %p139, %p140
      %p142 = scmp.ne.s32.totalorder %s131, %s134
      %p143 = scmp.eq.s32.totalorder %s23, 7
      %p144 = por %p142, %p143
      %p145 = scmp.ne.s32.totalorder %s134, %s135
      %p146 = scmp.eq.s32.totalorder %s23, 0
      %p147 = por %p145, %p146
      %p148 = scmp.ne.s32.totalorder %s134, %s135
      %p149 = scmp.eq.s32.totalorder %s24, 7
      %p150 = por %p148, %p149
      %p152 = scmp.ne.s32.totalorder %s135, %s151
      %p153 = scmp.eq.s32.totalorder %s24, 0
      %p154 = por %p152, %p153
      %p155 = scmp.le.s32.totalorder 1, %s18
      %p156 = scmp.lt.s32.totalorder %s18, 9
      %p157 = pnand %p155, %p156
      %p158 = pneg %p157
      // Predicated region
      $region9: #{tpu_custom_call.1} parent=5 // pred_check
        _
      $region10: #{tpu_custom_call.1} parent=5 // pred_check_branch
        %160 = sbr.rel (%p157) target = $region12
      $region11: #{tpu_custom_call.1} parent=5 // pred_region
        %s161 = ssub.s32 %s18, 1
      $region12: #{tpu_custom_call.1} parent=5 // pred_fallthru
        _
      %p162 = scmp.lt.s32.totalorder %s18, 8
      // Predicated region
      $region13: #{tpu_custom_call.1} parent=5 // pred_check
        %p163 = pneg %p162
      $region14: #{tpu_custom_call.1} parent=5 // pred_check_branch
        %165 = sbr.rel (%p163) target = $region16
      $region15: #{tpu_custom_call.1} parent=5 // pred_region
        // Predicated region
        $region17: #{tpu_custom_call.1} parent=15 // pred_check
          %p166 = pneg %p59
        $region18: #{tpu_custom_call.1} parent=15 // pred_check_branch
          %168 = sbr.rel (%p166) target = $region20
        $region19: #{tpu_custom_call.1} parent=15 // pred_region
          %s169 = sand.u32 %s49, 1
          %s170 = scalar_lea.sflag [#allocation4], %s169
          %s171 = sand.u32 %s49, 1
          %s172 = smul.addr %s171, 8
          %s173 = scalar_lea.vmem [#allocation3], %s172
          %s174 = smul.u32 2, %s26
          %s176 = ssub.s32 128, 128
          %177 = vsyncadd %s170, %s176
          %s178 = smul.addr %s174, 2
          %s179 = sadd.s32 %s27, %s178
          %s180 = smul.addr %s179, 64
          %s181 = scalar_lea.hbm %s0, %s180
          %s182 = sshll.u32 %s173, 4
          %s183 = int_to_ptr.vmem [resolvable:$true] %s182
          %188 = dma.hbm_to_vmem [thread:$0]  %s181, 128, %s183, %s170, 128, 64, 4
        $region20: #{tpu_custom_call.1} parent=15 // pred_fallthru
          _
        // Predicated region
        $region21: #{tpu_custom_call.1} parent=15 // pred_check
          %p189 = pneg %p87
        $region22: #{tpu_custom_call.1} parent=15 // pred_check_branch
          %191 = sbr.rel (%p189) target = $region24
        $region23: #{tpu_custom_call.1} parent=15 // pred_region
          %s192 = sand.u32 %s77, 1
          %s193 = scalar_lea.sflag [#allocation7], %s192
          %s194 = sand.u32 %s77, 1
          %s195 = smul.addr %s194, 128
          %s196 = scalar_lea.vmem [#allocation6], %s195
          %s197 = smul.u32 16, %s27
          %s198 = smul.u32 2, %s25
          %s200 = ssub.s32 2048, 2048
          %201 = vsyncadd %s193, %s200
          %s202 = smul.addr %s197, 4
          %s203 = sadd.s32 %s198, %s202
          %s204 = smul.addr %s203, 64
          %s205 = scalar_lea.hbm %s1, %s204
          %s206 = sshll.u32 %s196, 4
          %s207 = int_to_ptr.vmem [resolvable:$true] %s206
          %212 = dma.hbm_to_vmem [thread:$0]  %s205, 2048, %s207, %s193, 256, 128, 8
        $region24: #{tpu_custom_call.1} parent=15 // pred_fallthru
          _
        // Predicated region
        $region25: #{tpu_custom_call.1} parent=15 // pred_check
          %p213 = pneg %p113
        $region26: #{tpu_custom_call.1} parent=15 // pred_check_branch
          %215 = sbr.rel (%p213) target = $region28
        $region27: #{tpu_custom_call.1} parent=15 // pred_region
          %s216 = smul.u32 2, %s25
          %p217 = scmp.lt.s32.totalorder %s216, 3
          %s218 = scalar_select %p217, %s216, 3
          %s219 = scalar_lea.vmem %s2, %s218
          %s220 = smul.u32 2, %s25
        $region28: #{tpu_custom_call.1} parent=15 // pred_fallthru
          _
      $region16: #{tpu_custom_call.1} parent=5 // pred_fallthru
        _
      %p221 = scmp.le.s32.totalorder 1, %s18
      %p222 = scmp.lt.s32.totalorder %s18, 9
      %p223 = pnand %p221, %p222
      %p224 = pneg %p223
      // Predicated region
      $region29: #{tpu_custom_call.1} parent=5 // pred_check
        _
      $region30: #{tpu_custom_call.1} parent=5 // pred_check_branch
        %226 = sbr.rel (%p223) target = $region32
      $region31: #{tpu_custom_call.1} parent=5 // pred_region
        %s227 = ssub.s32 %s18, 1
        %s228 = sand.u32 %s52, 1
        %s229 = scalar_lea.sflag [#allocation4], %s228
        %s230 = sand.u32 %s52, 1
        %s231 = smul.addr %s230, 8
        %s232 = scalar_lea.vmem [#allocation3], %s231
        // Predicated region
        $region33: #{tpu_custom_call.1} parent=31 // pred_check
          %p233 = pneg %p65
        $region34: #{tpu_custom_call.1} parent=31 // pred_check_branch
          %235 = sbr.rel (%p233) target = $region36
        $region35: #{tpu_custom_call.1} parent=31 // pred_region
          %236 = dma.done %s229, 128
        $region36: #{tpu_custom_call.1} parent=31 // pred_fallthru
          _
        %s237 = sand.u32 %s80, 1
        %s238 = scalar_lea.sflag [#allocation7], %s237
        %s239 = sand.u32 %s80, 1
        %s240 = smul.addr %s239, 128
        %s241 = scalar_lea.vmem [#allocation6], %s240
        // Predicated region
        $region37: #{tpu_custom_call.1} parent=31 // pred_check
          %p242 = pneg %p93
        $region38: #{tpu_custom_call.1} parent=31 // pred_check_branch
          %244 = sbr.rel (%p242) target = $region40
        $region39: #{tpu_custom_call.1} parent=31 // pred_region
          %245 = dma.done %s238, 2048
        $region40: #{tpu_custom_call.1} parent=31 // pred_fallthru
          _
        %s246 = sand.u32 %s52, 1
        %s247 = scalar_lea.sflag [#allocation4], %s246
        %s248 = sand.u32 %s52, 1
        %s249 = smul.addr %s248, 8
        %s250 = scalar_lea.vmem [#allocation3], %s249
        %p251 = pneg %p65
        %p252 = pneg %p62
        %s253 = sand.u32 %s80, 1
        %s254 = scalar_lea.sflag [#allocation7], %s253
        %s255 = sand.u32 %s80, 1
        %s256 = smul.addr %s255, 128
        %s257 = scalar_lea.vmem [#allocation6], %s256
        %p258 = pneg %p93
        %p259 = pneg %p90
        %s260 = smul.u32 2, %s28
        %p261 = scmp.lt.s32.totalorder %s260, 3
        %s262 = scalar_select %p261, %s260, 3
        %s263 = scalar_lea.vmem %s2, %s262
        %p264 = pneg %p119
        %p265 = pneg %p116
        %p266 = pneg %p147
        %p267 = pneg %p144
        %s268 = sand.u32 %s134, 1
        %s269 = scalar_lea.sflag [#allocation5], %s268
        %s270 = sand.u32 %s134, 1
        %s271 = smul.addr %s270, 32
        %s272 = scalar_lea.vmem [#allocation8], %s271
        %s273 = smul.u32 2, %s29
        %s274 = smul.u32 16, %s30
        %s275 = smul.u32 2, %s28
        %s276 = smul.u32 2, %s28
        %p277 = scmp.lt.s32.totalorder %s276, 3
        %s278 = scalar_select %p277, %s276, 3
        %s279 = scalar_lea.vmem %s2, %s278
        %s280 = smul.u32 2, %s28
        %s281 = smul.u32 2, %s29
        %s282 = smul.u32 2, %s28
        %p284 = scmp.eq.s32.totalorder %s30, 0
        // Predicated region
        $region41: #{tpu_custom_call.1} parent=31 // pred_check
          %p285 = pneg %p284
        $region42: #{tpu_custom_call.1} parent=31 // pred_check_branch
          %287 = sbr.rel (%p285) target = $region44
        $region43: #{tpu_custom_call.1} parent=31 // pred_region
          %288 = vst [vmem:[#allocation2] sm:$0xff] 0.0
          %289 = vst [vmem:[#allocation2 + $0x8] sm:$0xff] 0.0
          %290 = vst [vmem:[#allocation2 + $0x10] sm:$0xff] 0.0
          %291 = vst [vmem:[#allocation2 + $0x18] sm:$0xff] 0.0
        $region44: #{tpu_custom_call.1} parent=31 // pred_fallthru
          _
        %v292 = vld [vmem:[#allocation2] sm:$0xff]
        %v293 = vld [vmem:[#allocation2 + $0x8] sm:$0xff]
        %v294 = vld [vmem:[#allocation2 + $0x10] sm:$0xff]
        %v295 = vld [vmem:[#allocation2 + $0x18] sm:$0xff]
        %v296 = vld [vmem:[%s232] sm:$0xf]
        %v297 = vld [vmem:[%s232 + $0x4] sm:$0xf]
        %v298 = vld [vmem:[%s241] sm:$0xff]
        %v299 = vld [vmem:[%s241 + $0x8] sm:$0xff]
        %v300 = vld [vmem:[%s241 + $0x10] sm:$0xff]
        %v301 = vld [vmem:[%s241 + $0x18] sm:$0xff]
        %v302 = vld [vmem:[%s241 + $0x20] sm:$0xff]
        %v303 = vld [vmem:[%s241 + $0x28] sm:$0xff]
        %v304 = vld [vmem:[%s241 + $0x30] sm:$0xff]
        %v305 = vld [vmem:[%s241 + $0x38] sm:$0xff]
        %v306 = vld [vmem:[%s241 + $0x40] sm:$0xff]
        %v307 = vld [vmem:[%s241 + $0x48] sm:$0xff]
        %v308 = vld [vmem:[%s241 + $0x50] sm:$0xff]
        %v309 = vld [vmem:[%s241 + $0x58] sm:$0xff]
        %v310 = vld [vmem:[%s241 + $0x60] sm:$0xff]
        %v311 = vld [vmem:[%s241 + $0x68] sm:$0xff]
        %v312 = vld [vmem:[%s241 + $0x70] sm:$0xff]
        %v313 = vld [vmem:[%s241 + $0x78] sm:$0xff]
        %v316 = vunpack.c.l.b16 %v296
        %v317 = vunpack.c.l.b16 %v297
        %v318 = vpack.c.b16 %v317, %v316
        %v336 = vunpack.c.l.b16 %v298
        %v337 = vunpack.c.h.b16 %v298
        %v338 = vunpack.c.l.b16 %v299
        %v339 = vunpack.c.h.b16 %v299
        %v340 = vunpack.c.l.b16 %v300
        %v341 = vunpack.c.h.b16 %v300
        %v342 = vunpack.c.l.b16 %v301
        %v343 = vunpack.c.h.b16 %v301
        %v344 = vunpack.c.l.b16 %v302
        %v345 = vunpack.c.h.b16 %v302
        %v346 = vunpack.c.l.b16 %v303
        %v347 = vunpack.c.h.b16 %v303
        %v348 = vunpack.c.l.b16 %v304
        %v349 = vunpack.c.h.b16 %v304
        %v350 = vunpack.c.l.b16 %v305
        %v351 = vunpack.c.h.b16 %v305
        %v352 = vunpack.c.l.b16 %v306
        %v353 = vunpack.c.h.b16 %v306
        %v354 = vunpack.c.l.b16 %v307
        %v355 = vunpack.c.h.b16 %v307
        %v356 = vunpack.c.l.b16 %v308
        %v357 = vunpack.c.h.b16 %v308
        %v358 = vunpack.c.l.b16 %v309
        %v359 = vunpack.c.h.b16 %v309
        %v360 = vunpack.c.l.b16 %v310
        %v361 = vunpack.c.h.b16 %v310
        %v362 = vunpack.c.l.b16 %v311
        %v363 = vunpack.c.h.b16 %v311
        %v364 = vunpack.c.l.b16 %v312
        %v365 = vunpack.c.h.b16 %v312
        %v366 = vunpack.c.l.b16 %v313
        %v367 = vunpack.c.h.b16 %v313
        %v368 = vpack.c.b16 %v338, %v336
        %v369 = vpack.c.b16 %v339, %v337
        %v370 = vpack.c.b16 %v342, %v340
        %v371 = vpack.c.b16 %v343, %v341
        %v372 = vpack.c.b16 %v346, %v344
        %v373 = vpack.c.b16 %v347, %v345
        %v374 = vpack.c.b16 %v350, %v348
        %v375 = vpack.c.b16 %v351, %v349
        %v376 = vpack.c.b16 %v354, %v352
        %v377 = vpack.c.b16 %v355, %v353
        %v378 = vpack.c.b16 %v358, %v356
        %v379 = vpack.c.b16 %v359, %v357
        %v380 = vpack.c.b16 %v362, %v360
        %v381 = vpack.c.b16 %v363, %v361
        %v382 = vpack.c.b16 %v366, %v364
        %v383 = vpack.c.b16 %v367, %v365
        %400 = vmatprep.subr.bf16.mxu0 %v369
        %401 = vmatpush1.bf16.msra.mxu0 %v368
        %402 = vmatprep.subr.bf16.mxu0 %v371
        %403 = vmatpush1.bf16.msra.mxu0 %v370
        %404 = vmatprep.subr.bf16.mxu0 %v373
        %405 = vmatpush1.bf16.msra.mxu0 %v372
        %406 = vmatprep.subr.bf16.mxu0 %v375
        %407 = vmatpush1.bf16.msra.mxu0 %v374
        %408 = vmatprep.subr.bf16.mxu0 %v377
        %409 = vmatpush1.bf16.msra.mxu0 %v376
        %410 = vmatprep.subr.bf16.mxu0 %v379
        %411 = vmatpush1.bf16.msra.mxu0 %v378
        %412 = vmatprep.subr.bf16.mxu0 %v381
        %413 = vmatpush1.bf16.msra.mxu0 %v380
        %414 = vmatprep.subr.bf16.mxu0 %v383
        %415 = vmatpush1.bf16.msra.mxu0 %v382
        %416 = vmatprep.subr.bf16.mxu0 0
        %417 = vmatpush1.bf16.msra.mxu0 0
        %418 = vmatprep.subr.bf16.mxu0 0
        %419 = vmatpush1.bf16.msra.mxu0 0
        %420 = vmatprep.subr.bf16.mxu0 0
        %421 = vmatpush1.bf16.msra.mxu0 0
        %422 = vmatprep.subr.bf16.mxu0 0
        %423 = vmatpush1.bf16.msra.mxu0 0
        %424 = vmatprep.subr.bf16.mxu0 0
        %425 = vmatpush1.bf16.msra.mxu0 0
        %426 = vmatprep.subr.bf16.mxu0 0
        %427 = vmatpush1.bf16.msra.mxu0 0
        %428 = vmatprep.subr.bf16.mxu0 0
        %429 = vmatpush1.bf16.msra.mxu0 0
        %430 = vmatprep.subr.bf16.mxu0 0
        %431 = vmatpush1.bf16.msra.mxu0 0
        %432 = vmatprep.mubr.bf16.mxu0 0
        %433 = vmatmul.mubr.bf16.gmra.mrb[0].mxu0 %v318
        %v434 = vpop.f32.mrb[0].mxu0
        %v435 = vadd.f32 0.0, %v434
        %v436 = vpop.f32.mrb[0].mxu0
        %v437 = vadd.f32 0.0, %v436
        %v438 = vpop.f32.mrb[0].mxu0
        %v439 = vadd.f32 0.0, %v438
        %v440 = vpop.f32.mrb[0].mxu0
        %v441 = vadd.f32 0.0, %v440
        %442 = vdwg.mxu0
        %v443 = vadd.f32 %v292, %v435
        %v444 = vadd.f32 %v293, %v437
        %v445 = vadd.f32 %v294, %v439
        %v446 = vadd.f32 %v295, %v441
        %447 = vst [vmem:[#allocation2] sm:$0xff] %v443
        %448 = vst [vmem:[#allocation2 + $0x8] sm:$0xff] %v444
        %449 = vst [vmem:[#allocation2 + $0x10] sm:$0xff] %v445
        %450 = vst [vmem:[#allocation2 + $0x18] sm:$0xff] %v446
        %p451 = scmp.eq.s32.totalorder %s30, 1
        // Predicated region
        $region45: #{tpu_custom_call.1} parent=31 // pred_check
          %p452 = pneg %p451
        $region46: #{tpu_custom_call.1} parent=31 // pred_check_branch
          %454 = sbr.rel (%p452) target = $region48
        $region47: #{tpu_custom_call.1} parent=31 // pred_region
          %v455 = vld [vmem:[#allocation2] sm:$0xff]
          %v456 = vld [vmem:[#allocation2 + $0x8] sm:$0xff]
          %v457 = vld [vmem:[#allocation2 + $0x10] sm:$0xff]
          %v458 = vld [vmem:[#allocation2 + $0x18] sm:$0xff]
          %v459 = vld [vmem:[%s279] sm:$0x3]
          %v461 = vlaneseq
          %v462 = vshrl.u32 %v461, 7
          %v463 = vsub.s32 0, %v462
          %v464 = vrot.slane %v459, %v463
          %v465 = vlaneseq
          %v466 = vshrl.u32 %v465, 7
          %v467 = vsub.s32 1, %v466
          %v468 = vrot.slane %v459, %v467
          %v471 = vadd.f32 %v455, %v464
          %v472 = vadd.f32 %v456, %v468
          %v473 = vadd.f32 %v457, %v464
          %v474 = vadd.f32 %v458, %v468
          %475 = vst [vmem:[%s272] sm:$0xff] %v471
          %476 = vst [vmem:[%s272 + $0x8] sm:$0xff] %v472
          %477 = vst [vmem:[%s272 + $0x10] sm:$0xff] %v473
          %478 = vst [vmem:[%s272 + $0x18] sm:$0xff] %v474
        $region48: #{tpu_custom_call.1} parent=31 // pred_fallthru
          _
        %s479 = sand.u32 %s134, 1
        %s480 = scalar_lea.sflag [#allocation5], %s479
        %s481 = sand.u32 %s134, 1
        %s482 = smul.addr %s481, 32
        %s483 = scalar_lea.vmem [#allocation8], %s482
        // Predicated region
        $region49: #{tpu_custom_call.1} parent=31 // pred_check
          %p484 = pneg %p144
        $region50: #{tpu_custom_call.1} parent=31 // pred_check_branch
          %486 = sbr.rel (%p484) target = $region52
        $region51: #{tpu_custom_call.1} parent=31 // pred_region
          %s487 = smul.u32 2, %s29
          %s488 = smul.u32 2, %s28
          %s490 = ssub.s32 512, 512
          %491 = vsyncadd %s480, %s490
          %s492 = smul.addr %s487, 4
          %s493 = sadd.s32 %s488, %s492
          %s494 = smul.addr %s493, 128
          %s495 = scalar_lea.hbm %s3, %s494
          %s496 = sshll.u32 %s483, 4
          %s497 = int_to_ptr.vmem [resolvable:$true] %s496
          %502 = dma.vmem_to_hbm [thread:$0]  %s497, 512, %s495, %s480, 256, 512, 16
        $region52: #{tpu_custom_call.1} parent=31 // pred_fallthru
          _
      $region32: #{tpu_custom_call.1} parent=5 // pred_fallthru
        _
      %p503 = scmp.le.s32.totalorder 2, %s18
      // Predicated region
      $region53: #{tpu_custom_call.1} parent=5 // pred_check
        %p504 = pneg %p503
      $region54: #{tpu_custom_call.1} parent=5 // pred_check_branch
        %506 = sbr.rel (%p504) target = $region56
      $region55: #{tpu_custom_call.1} parent=5 // pred_region
        %s507 = ssub.s32 %s18, 2
        // Predicated region
        $region57: #{tpu_custom_call.1} parent=55 // pred_check
          %p508 = pneg %p150
        $region58: #{tpu_custom_call.1} parent=55 // pred_check_branch
          %510 = sbr.rel (%p508) target = $region60
        $region59: #{tpu_custom_call.1} parent=55 // pred_region
          %s511 = sand.u32 %s135, 1
          %s512 = scalar_lea.sflag [#allocation5], %s511
          %s513 = sand.u32 %s135, 1
          %s514 = smul.addr %s513, 32
          %s515 = scalar_lea.vmem [#allocation8], %s514
          %516 = dma.done %s512, 512
        $region60: #{tpu_custom_call.1} parent=55 // pred_fallthru
          _
      $region56: #{tpu_custom_call.1} parent=5 // pred_fallthru
        _
    $region6: #{tpu_custom_call.1} parent=1 // loop_footer
      %s22 = sadd.s32 1, %s18
    $region7: #{tpu_custom_call.1} parent=1 // loop_footer_branch
      %17 = sbr.rel target = $region3
    $region8: #{tpu_custom_call.1} parent=1 // loop_exit
      _
    %517 = vsyncpa [#allocation4], 1
    %s518 = scalar_lea.sflag [#allocation4], 1
    %519 = vsyncpa %s518, 1
    %520 = vsyncpa [#allocation7], 1
    %s521 = scalar_lea.sflag [#allocation7], 1
    %522 = vsyncpa %s521, 1
    %523 = vsyncpa [#allocation5], 1
    %s524 = scalar_lea.sflag [#allocation5], 1
    %525 = vsyncpa %s524, 1

</llo_original>
